<compile_context>
chip_gen: v6e
topology: v6e:2x2x1
jax: 0.10.0
libtpu: 0.0.40
codegen_flags: <defaults>
</compile_context>

<pallas_src>
import functools

import jax
import jax.numpy as jnp
from jax.experimental import pallas as pl
from jax.experimental.pallas import tpu as pltpu

# ---- Parameters() (synthetic, deterministic, small) ------------------------
GAMMA = 0.99          # unused in forward, kept for parity with the module
EPS_CLIP = 0.1
LAYERS1_NUM = 32      # input feature size
LAYERS2_NUM = 64      # hidden size
OUT_NUM = 2           # number of actions (matches vs = [[1,0],[0,1]])

_MAX_BATCH_TILE = 2048
_VMEM = pl.BlockSpec(memory_space=pltpu.MemorySpace.VMEM)


def _mlp(x, w1, b1, w2, b2):
    """self.layers: Linear -> ReLU -> Linear (MXU/VPU inside the kernel)."""
    h = jnp.dot(x, w1, preferred_element_type=jnp.float32) + b1
    h = jnp.maximum(h, 0.0)
    return jnp.dot(h, w2, preferred_element_type=jnp.float32) + b2


# ---- Pallas kernels ---------------------------------------------------------
def _probs_kernel(x_ref, w1_ref, b1_ref, w2_ref, b2_ref, probs_ref):
    """Fused Linear -> ReLU -> Linear -> softmax (inference branch)."""
    logits = _mlp(x_ref[...], w1_ref[...], b1_ref[...],
                  w2_ref[...], b2_ref[...])
    m = jnp.max(logits, axis=1, keepdims=True)
    e = jnp.exp(logits - m)
    probs_ref[...] = e / jnp.sum(e, axis=1, keepdims=True)


def _ppo_loss_kernel(x_ref, act_ref, aux_ref, w1_ref, b1_ref, w2_ref, b2_ref,
                     loss_ref, *, batch, tile):
    """Per-batch-tile clipped-surrogate partial sum into a resident (1,1) acc."""
    i = pl.program_id(0)

    @pl.when(i == 0)
    def _():
        loss_ref[...] = jnp.zeros_like(loss_ref)

    logits = _mlp(x_ref[...], w1_ref[...], b1_ref[...],
                  w2_ref[...], b2_ref[...])

    # softmax(logits, dim=1); divide moved to EUP via approx reciprocal
    m = jnp.max(logits, axis=1, keepdims=True)
    e = jnp.exp(logits - m)
    p = e * pl.reciprocal(jnp.sum(e, axis=1, keepdims=True), approx=True)

    # one-hot(action) built in-kernel from the int32 action column
    act = act_ref[...]                                        # (TB, 1) int32
    ts = (jax.lax.broadcasted_iota(jnp.int32, p.shape, 1) == act
          ).astype(jnp.float32)                               # (TB, OUT)

    aux = aux_ref[...]                                        # (TB, 2)
    ap = jnp.maximum(aux[:, 0:1], 1e-8)   # clamp old prob so r stays finite
    adv = aux[:, 1:2]

    r = jnp.sum(p * ts, axis=1, keepdims=True) / ap           # (TB, 1)
    loss1 = r * adv
    loss2 = jnp.clip(r, 1.0 - EPS_CLIP, 1.0 + EPS_CLIP) * adv
    per_row = -jnp.minimum(loss1, loss2)                      # (TB, 1)

    # mask rows beyond the real batch on a ragged last tile
    row = jax.lax.broadcasted_iota(jnp.int32, per_row.shape, 0) + i * tile
    per_row = jnp.where(row < batch, per_row, 0.0)

    loss_ref[...] += jnp.sum(per_row).reshape(1, 1)

    @pl.when(i == pl.num_programs(0) - 1)
    def _():
        loss_ref[...] = loss_ref[...] / batch                 # true-B mean


# ---- Wrappers ---------------------------------------------------------------
def ppo_probs(d_obs, params):
    """Kernel-fused action probabilities (softmax done in VMEM)."""
    w1, b1, w2, b2 = params
    B = d_obs.shape[0]
    return pl.pallas_call(
        _probs_kernel,
        out_shape=jax.ShapeDtypeStruct((B, OUT_NUM), jnp.float32),
        in_specs=[_VMEM] * 5,
        out_specs=_VMEM,
    )(d_obs, w1, b1, w2, b2)


@jax.jit
def ppo_loss(d_obs, action, action_prob, advantage, params):
    """Training branch of PPO.forward (clipped surrogate objective)."""
    w1, b1, w2, b2 = params
    B, D1 = d_obs.shape
    D2 = w1.shape[1]

    tb = min(_MAX_BATCH_TILE, max(8, ((B + 7) // 8) * 8))
    grid = (pl.cdiv(B, tb),)

    act = action.reshape(-1, 1).astype(jnp.int32)                    # (B, 1)
    aux = jnp.concatenate([action_prob.reshape(-1, 1),
                           advantage.reshape(-1, 1)],
                          axis=1).astype(jnp.float32)                # (B, 2)

    kernel = functools.partial(_ppo_loss_kernel, batch=B, tile=tb)
    loss = pl.pallas_call(
        kernel,
        out_shape=jax.ShapeDtypeStruct((1, 1), jnp.float32),
        grid=grid,
        in_specs=[
            pl.BlockSpec((tb, D1), lambda i: (i, 0)),       # d_obs (tiled)
            pl.BlockSpec((tb, 1), lambda i: (i, 0)),        # action (tiled)
            pl.BlockSpec((tb, 2), lambda i: (i, 0)),        # [ap, adv] (tiled)
            pl.BlockSpec((D1, D2), lambda i: (0, 0)),       # w1 (resident)
            pl.BlockSpec((1, D2), lambda i: (0, 0)),        # b1
            pl.BlockSpec((D2, OUT_NUM), lambda i: (0, 0)),  # w2
            pl.BlockSpec((1, OUT_NUM), lambda i: (0, 0)),   # b2
        ],
        out_specs=pl.BlockSpec((1, 1), lambda i: (0, 0)),   # resident acc
        compiler_params=pltpu.CompilerParams(
            dimension_semantics=("arbitrary",)),            # reduction axis
    )(d_obs, act, aux, w1, b1, w2, b2)
    return loss[0, 0]


@jax.jit
def _act_deterministic(d_obs, params):
    probs = ppo_probs(d_obs, params)
    return jnp.argmax(probs[0]), jnp.float32(1.0)


@jax.jit
def _act_sample(d_obs, params, key):
    probs = ppo_probs(d_obs, params)
    a = jax.random.categorical(key, jnp.log(probs[0]))
    return a, probs[0, a]


def ppo_forward(d_obs, params, action=None, action_prob=None, advantage=None,
                deterministic=False, key=None):
    """Mirrors PPO.forward; inference returns jnp scalars (no host syncs)."""
    if action is None:
        if deterministic:
            return _act_deterministic(d_obs, params)
        return _act_sample(d_obs, params, key)
    return ppo_loss(d_obs, action, action_prob, advantage, params)


def convert_action(action):
    return action + 2


# ---- Deterministic parameter init ------------------------------------------
def init_params(key):
    k1, k2, k3, k4 = jax.random.split(key, 4)
    bound1 = 1.0 / (LAYERS1_NUM ** 0.5)
    bound2 = 1.0 / (LAYERS2_NUM ** 0.5)
    w1 = jax.random.uniform(k1, (LAYERS1_NUM, LAYERS2_NUM), jnp.float32,
                            -bound1, bound1)
    b1 = jax.random.uniform(k2, (1, LAYERS2_NUM), jnp.float32, -bound1, bound1)
    w2 = jax.random.uniform(k3, (LAYERS2_NUM, OUT_NUM), jnp.float32,
                            -bound2, bound2)
    b2 = jax.random.uniform(k4, (1, OUT_NUM), jnp.float32, -bound2, bound2)
    return w1, b1, w2, b2


if __name__ == "__main__":
    root = jax.random.PRNGKey(0)
    kp, kx, ka, kap, kadv, ksample = jax.random.split(root, 6)

    params = init_params(kp)

    B = 8
    d_obs = jax.random.normal(kx, (B, LAYERS1_NUM), jnp.float32)
    action = jax.random.randint(ka, (B,), 0, OUT_NUM)
    action_prob = jax.random.uniform(kap, (B,), jnp.float32, 0.3, 0.7)
    advantage = jax.random.normal(kadv, (B,), jnp.float32)

    # Training branch: PPO clipped surrogate loss (scalar)
    loss = ppo_forward(d_obs, params, action=action, action_prob=action_prob,
                       advantage=advantage)
    loss = jax.block_until_ready(loss)

    # Inference branch: deterministic (argmax) and stochastic (sampled) —
    # returned as device scalars; test harness syncs only for the asserts.
    a_det, p_det = ppo_forward(d_obs[:1], params, deterministic=True)
    a_smp, p_smp = ppo_forward(d_obs[:1], params, deterministic=False,
                               key=ksample)
    jax.block_until_ready((a_det, p_det, a_smp, p_smp))

    assert loss.shape == () and jnp.isfinite(loss)
    assert p_det == 1.0 and 0 <= a_det < OUT_NUM
    assert 0.0 < p_smp <= 1.0 and 0 <= a_smp < OUT_NUM
    _ = convert_action(a_det)

    print("KERNEL_OK")
</pallas_src>

<mosaic_0001>
module attributes {stable_mosaic.version = 11 : i64} {
  func.func @_ppo_loss_kernel(%arg0: i32, %arg1: memref<8x32xf32, #tpu.memory_space<vmem>>, %arg2: memref<8x1xi32, #tpu.memory_space<vmem>>, %arg3: memref<8x2xf32, #tpu.memory_space<vmem>>, %arg4: memref<32x64xf32, #tpu.memory_space<vmem>>, %arg5: memref<1x64xf32, #tpu.memory_space<vmem>>, %arg6: memref<64x2xf32, #tpu.memory_space<vmem>>, %arg7: memref<1x2xf32, #tpu.memory_space<vmem>>, %arg8: memref<1x1xf32, #tpu.memory_space<vmem>>) attributes {dimension_semantics = [#tpu.dimension_semantics<arbitrary>], iteration_bounds = array<i64: 1>, scalar_prefetch = 0 : i64, scratch_operands = 0 : i64, tpu.core_type = #tpu.core_type<tc>, window_params = [{transform_indices = @transform_0, window_bounds = array<i64: 8, 32>}, {transform_indices = @transform_1, window_bounds = array<i64: 8, 1>}, {transform_indices = @transform_2, window_bounds = array<i64: 8, 2>}, {pipeline_mode = #tpu.pipeline_mode<synchronous>, transform_indices = @transform_3, window_bounds = array<i64: 32, 64>}, {pipeline_mode = #tpu.pipeline_mode<synchronous>, transform_indices = @transform_4, window_bounds = array<i64: 1, 64>}, {pipeline_mode = #tpu.pipeline_mode<synchronous>, transform_indices = @transform_5, window_bounds = array<i64: 64, 2>}, {pipeline_mode = #tpu.pipeline_mode<synchronous>, transform_indices = @transform_6, window_bounds = array<i64: 1, 2>}, {pipeline_mode = #tpu.pipeline_mode<synchronous>, transform_indices = @transform_7, window_bounds = array<i64: 1, 1>}]} {
    %c0_i32 = arith.constant 0 : i32
    %0 = arith.cmpi eq, %arg0, %c0_i32 : i32
    %1 = arith.extui %0 : i1 to i32
    %c0_i32_0 = arith.constant 0 : i32
    %2 = arith.cmpi ne, %1, %c0_i32_0 : i32
    scf.if %2 {
      %cst_32 = arith.constant 0.000000e+00 : f32
      %69 = vector.broadcast %cst_32 : f32 to vector<1x1xf32>
      %c0_33 = arith.constant 0 : index
      %c0_34 = arith.constant 0 : index
      %70 = vector.load %arg8[%c0_33, %c0_34] : memref<1x1xf32, #tpu.memory_space<vmem>>, vector<1x1xf32>
      tpu.vector_store %arg8[%c0_33, %c0_34], %69 {strides = array<i32>} : memref<1x1xf32, #tpu.memory_space<vmem>>, vector<1x1xf32>,
    } else {
    }
    %c0 = arith.constant 0 : index
    %c0_1 = arith.constant 0 : index
    %3 = vector.load %arg1[%c0, %c0_1] : memref<8x32xf32, #tpu.memory_space<vmem>>, vector<8x32xf32>
    %c0_2 = arith.constant 0 : index
    %c0_3 = arith.constant 0 : index
    %4 = vector.load %arg4[%c0_2, %c0_3] : memref<32x64xf32, #tpu.memory_space<vmem>>, vector<32x64xf32>
    %c0_4 = arith.constant 0 : index
    %c0_5 = arith.constant 0 : index
    %5 = vector.load %arg5[%c0_4, %c0_5] : memref<1x64xf32, #tpu.memory_space<vmem>>, vector<1x64xf32>
    %c0_6 = arith.constant 0 : index
    %c0_7 = arith.constant 0 : index
    %6 = vector.load %arg6[%c0_6, %c0_7] : memref<64x2xf32, #tpu.memory_space<vmem>>, vector<64x2xf32>
    %c0_8 = arith.constant 0 : index
    %c0_9 = arith.constant 0 : index
    %7 = vector.load %arg7[%c0_8, %c0_9] : memref<1x2xf32, #tpu.memory_space<vmem>>, vector<1x2xf32>
    %cst = arith.constant dense<0.000000e+00> : vector<8x64xf32>
    %8 = tpu.matmul %3, %4, %cst {dimension_numbers = #tpu.dot_dimension_numbers<[1], [0], [0], [1], [0, 0, 1, 1], [], []>} : vector<8x32xf32>, vector<32x64xf32>, vector<8x64xf32> -> vector<8x64xf32>
    %9 = vector.broadcast %5 : vector<1x64xf32> to vector<8x64xf32>
    %10 = arith.addf %8, %9 : vector<8x64xf32>
    %cst_10 = arith.constant 0.000000e+00 : f32
    %11 = vector.broadcast %cst_10 : f32 to vector<8x64xf32>
    %12 = arith.maximumf %10, %11 : vector<8x64xf32>
    %cst_11 = arith.constant dense<0.000000e+00> : vector<8x2xf32>
    %13 = tpu.matmul %12, %6, %cst_11 {dimension_numbers = #tpu.dot_dimension_numbers<[1], [0], [0], [1], [0, 0, 1, 1], [], []>} : vector<8x64xf32>, vector<64x2xf32>, vector<8x2xf32> -> vector<8x2xf32>
    %14 = vector.broadcast %7 : vector<1x2xf32> to vector<8x2xf32>
    %15 = arith.addf %13, %14 : vector<8x2xf32>
    %cst_12 = arith.constant dense<0xFF800000> : vector<8xf32>
    %16 = vector.multi_reduction <maximumf>, %15, %cst_12 [1] : vector<8x2xf32> to vector<8xf32>
    %17 = vector.shape_cast %16 : vector<8xf32> to vector<8x1xf32>
    %18 = vector.broadcast %17 : vector<8x1xf32> to vector<8x2xf32>
    %19 = arith.subf %15, %18 : vector<8x2xf32>
    %20 = math.exp %19 : vector<8x2xf32>
    %cst_13 = arith.constant dense<0.000000e+00> : vector<8xf32>
    %21 = vector.multi_reduction <add>, %20, %cst_13 [1] : vector<8x2xf32> to vector<8xf32>
    %22 = vector.shape_cast %21 : vector<8xf32> to vector<8x1xf32>
    %23 = tpu.reciprocal %22 {approx = true} : vector<8x1xf32> -> vector<8x1xf32>
    %24 = vector.broadcast %23 : vector<8x1xf32> to vector<8x2xf32>
    %25 = arith.mulf %20, %24 : vector<8x2xf32>
    %c0_14 = arith.constant 0 : index
    %c0_15 = arith.constant 0 : index
    %26 = vector.load %arg2[%c0_14, %c0_15] : memref<8x1xi32, #tpu.memory_space<vmem>>, vector<8x1xi32>
    %27 = tpu.iota {dimensions = array<i32: 1>} : vector<8x2xi32>
    %28 = vector.broadcast %26 : vector<8x1xi32> to vector<8x2xi32>
    %29 = arith.cmpi eq, %27, %28 : vector<8x2xi32>
    %30 = arith.extui %29 : vector<8x2xi1> to vector<8x2xi32>
    %31 = arith.sitofp %30 : vector<8x2xi32> to vector<8x2xf32>
    %c0_16 = arith.constant 0 : index
    %c0_17 = arith.constant 0 : index
    %32 = vector.load %arg3[%c0_16, %c0_17] : memref<8x2xf32, #tpu.memory_space<vmem>>, vector<8x2xf32>
    %33 = vector.extract_strided_slice %32 {offsets = [0, 0], sizes = [8, 1], strides = [1, 1]} : vector<8x2xf32> to vector<8x1xf32>
    %cst_18 = arith.constant 9.99999993E-9 : f32
    %34 = vector.broadcast %cst_18 : f32 to vector<8x1xf32>
    %35 = arith.maximumf %33, %34 : vector<8x1xf32>
    %36 = vector.extract_strided_slice %32 {offsets = [0, 1], sizes = [8, 1], strides = [1, 1]} : vector<8x2xf32> to vector<8x1xf32>
    %37 = arith.mulf %25, %31 : vector<8x2xf32>
    %cst_19 = arith.constant dense<0.000000e+00> : vector<8xf32>
    %38 = vector.multi_reduction <add>, %37, %cst_19 [1] : vector<8x2xf32> to vector<8xf32>
    %39 = vector.shape_cast %38 : vector<8xf32> to vector<8x1xf32>
    %40 = arith.divf %39, %35 : vector<8x1xf32>
    %41 = arith.mulf %40, %36 : vector<8x1xf32>
    %cst_20 = arith.constant 0.899999976 : f32
    %cst_21 = arith.constant 1.100000e+00 : f32
    %42 = vector.broadcast %cst_20 : f32 to vector<8x1xf32>
    %43 = arith.maximumf %42, %40 : vector<8x1xf32>
    %44 = vector.broadcast %cst_21 : f32 to vector<8x1xf32>
    %45 = arith.minimumf %44, %43 : vector<8x1xf32>
    %46 = arith.mulf %45, %36 : vector<8x1xf32>
    %47 = arith.minimumf %41, %46 : vector<8x1xf32>
    %cst_22 = arith.constant 0.000000e+00 : f32
    %48 = vector.broadcast %cst_22 : f32 to vector<8x1xf32>
    %49 = arith.subf %48, %47 : vector<8x1xf32>
    %50 = tpu.iota {dimensions = array<i32: 0>} : vector<8x1xi32>
    %c8_i32 = arith.constant 8 : i32
    %51 = arith.muli %arg0, %c8_i32 : i32
    %52 = vector.broadcast %51 : i32 to vector<8x1xi32>
    %53 = arith.addi %50, %52 : vector<8x1xi32>
    %c8_i32_23 = arith.constant 8 : i32
    %54 = vector.broadcast %c8_i32_23 : i32 to vector<8x1xi32>
    %55 = arith.cmpi slt, %53, %54 : vector<8x1xi32>
    %cst_24 = arith.constant 0.000000e+00 : f32
    %56 = vector.broadcast %cst_24 : f32 to vector<8x1xf32>
    %57 = arith.select %55, %49, %56 : vector<8x1xi1>, vector<8x1xf32>
    %c0_25 = arith.constant 0 : index
    %c0_26 = arith.constant 0 : index
    %58 = vector.load %arg8[%c0_25, %c0_26] : memref<1x1xf32, #tpu.memory_space<vmem>>, vector<1x1xf32>
    %59 = vector.shape_cast %57 : vector<8x1xf32> to vector<1x8x1xf32>
    %cst_27 = arith.constant dense<0.000000e+00> : vector<1xf32>
    %60 = vector.multi_reduction <add>, %59, %cst_27 [1, 2] : vector<1x8x1xf32> to vector<1xf32>
    %61 = vector.shape_cast %60 : vector<1xf32> to vector<1x1x1xf32>
    %62 = vector.extract %61[0, 0, 0] : f32 from vector<1x1x1xf32>
    %63 = vector.broadcast %62 : f32 to vector<1x1xf32>
    %64 = arith.addf %58, %63 : vector<1x1xf32>
    %c0_28 = arith.constant 0 : index
    %c0_29 = arith.constant 0 : index
    %65 = vector.load %arg8[%c0_28, %c0_29] : memref<1x1xf32, #tpu.memory_space<vmem>>, vector<1x1xf32>
    tpu.vector_store %arg8[%c0_28, %c0_29], %64 {strides = array<i32>} : memref<1x1xf32, #tpu.memory_space<vmem>>, vector<1x1xf32>,
    %c0_i32_30 = arith.constant 0 : i32
    %66 = arith.cmpi eq, %arg0, %c0_i32_30 : i32
    %67 = arith.extui %66 : i1 to i32
    %c0_i32_31 = arith.constant 0 : i32
    %68 = arith.cmpi ne, %67, %c0_i32_31 : i32
    scf.if %68 {
      %c0_32 = arith.constant 0 : index
      %c0_33 = arith.constant 0 : index
      %69 = vector.load %arg8[%c0_32, %c0_33] : memref<1x1xf32, #tpu.memory_space<vmem>>, vector<1x1xf32>
      %cst_34 = arith.constant 8.000000e+00 : f32
      %70 = vector.broadcast %cst_34 : f32 to vector<1x1xf32>
      %71 = arith.divf %69, %70 : vector<1x1xf32>
      %c0_35 = arith.constant 0 : index
      %c0_36 = arith.constant 0 : index
      %72 = vector.load %arg8[%c0_35, %c0_36] : memref<1x1xf32, #tpu.memory_space<vmem>>, vector<1x1xf32>
      tpu.vector_store %arg8[%c0_35, %c0_36], %71 {strides = array<i32>} : memref<1x1xf32, #tpu.memory_space<vmem>>, vector<1x1xf32>,
    } else {
    }
    return
  }
  func.func @transform_0(%arg0: i32) -> (i32, i32) {
    %c0_i32 = arith.constant 0 : i32
    %c0_i32_0 = arith.constant 0 : i32
    return %arg0, %c0_i32 : i32, i32
  }
  func.func @transform_1(%arg0: i32) -> (i32, i32) {
    %c0_i32 = arith.constant 0 : i32
    %c0_i32_0 = arith.constant 0 : i32
    return %arg0, %c0_i32 : i32, i32
  }
  func.func @transform_2(%arg0: i32) -> (i32, i32) {
    %c0_i32 = arith.constant 0 : i32
    %c0_i32_0 = arith.constant 0 : i32
    return %arg0, %c0_i32 : i32, i32
  }
  func.func @transform_3(%arg0: i32) -> (i32, i32) {
    %c0_i32 = arith.constant 0 : i32
    %c0_i32_0 = arith.constant 0 : i32
    %c0_i32_1 = arith.constant 0 : i32
    return %c0_i32, %c0_i32_0 : i32, i32
  }
  func.func @transform_4(%arg0: i32) -> (i32, i32) {
    %c0_i32 = arith.constant 0 : i32
    %c0_i32_0 = arith.constant 0 : i32
    %c0_i32_1 = arith.constant 0 : i32
    return %c0_i32, %c0_i32_0 : i32, i32
  }
  func.func @transform_5(%arg0: i32) -> (i32, i32) {
    %c0_i32 = arith.constant 0 : i32
    %c0_i32_0 = arith.constant 0 : i32
    %c0_i32_1 = arith.constant 0 : i32
    return %c0_i32, %c0_i32_0 : i32, i32
  }
  func.func @transform_6(%arg0: i32) -> (i32, i32) {
    %c0_i32 = arith.constant 0 : i32
    %c0_i32_0 = arith.constant 0 : i32
    %c0_i32_1 = arith.constant 0 : i32
    return %c0_i32, %c0_i32_0 : i32, i32
  }
  func.func @transform_7(%arg0: i32) -> (i32, i32) {
    %c0_i32 = arith.constant 0 : i32
    %c0_i32_0 = arith.constant 0 : i32
    %c0_i32_1 = arith.constant 0 : i32
    return %c0_i32, %c0_i32_0 : i32, i32
  }
}

</mosaic_0001>

<llo_original>
// kernel: ppo_loss.1
$region0: #{ppo_loss.1}
  #allocation0 [shape = 'u32[]', space=smem, size = 0x4, offset = 0x4, fixed_abs, tag = 'smem constant byte address 0x4 - core index']
  #allocation1 [shape = 'u32[144,128]{1,0:T(1,128)}', space=vmem, size = 0x12000, scoped, tag = 'internal scratch']
  %s0 = inlined_call_operand.vmem [shape: f32[8,32], index: 0, kind: input, shape index: {}]
  %s1 = inlined_call_operand.vmem [shape: s32[8,1], index: 1, kind: input, shape index: {}]
  %s2 = inlined_call_operand.vmem [shape: f32[8,2], index: 2, kind: input, shape index: {}]
  %s3 = inlined_call_operand.vmem [shape: f32[32,64], index: 3, kind: input, shape index: {}]
  %s4 = inlined_call_operand.vmem [shape: f32[1,64], index: 4, kind: input, shape index: {}]
  %s5 = inlined_call_operand.vmem [shape: f32[64,2], index: 5, kind: input, shape index: {}]
  %s6 = inlined_call_operand.vmem [shape: f32[1,2], index: 6, kind: input, shape index: {}]
  %s7 = inlined_call_operand.hbm [shape: f32[1,1], index: 7, kind: output, shape index: {}]
  %s8 = sld [smem:[#allocation0]]
  $region46: #{ppo_loss.1} parent=0
    _
  %s10 = ssub.s32 1, %s8
  %s11 = scalar_select 0, %s10, %s8
  $region1: #{ppo_loss.1} parent=0
    #allocation2 [shape = 'u8[512]{0}', space=vmem, size = 0x400, scoped, tag = 'output window, operand 0, single buffered']
    #allocation3 [shape = 's32[1]{0}', space=sflag, size = 0x4, scoped, tag = 'scoped memory for ppo_loss.1']
    %12 = vsyncpa [#allocation3], 0
    // Predicated region
    $region2: #{ppo_loss.1} parent=1 // pred_check
      _
    $region3: #{ppo_loss.1} parent=1 // pred_check_branch
      %14 = sbr.rel (0) target = $region5
    $region4: #{ppo_loss.1} parent=1 // pred_region
      _
    $region5: #{ppo_loss.1} parent=1 // pred_fallthru
      _
    // Predicated region
    $region6: #{ppo_loss.1} parent=1 // pred_check
      _
    $region7: #{ppo_loss.1} parent=1 // pred_check_branch
      %16 = sbr.rel (0) target = $region9
    $region8: #{ppo_loss.1} parent=1 // pred_region
      _
    $region9: #{ppo_loss.1} parent=1 // pred_fallthru
      _
    // Predicated region
    $region10: #{ppo_loss.1} parent=1 // pred_check
      _
    $region11: #{ppo_loss.1} parent=1 // pred_check_branch
      %18 = sbr.rel (0) target = $region13
    $region12: #{ppo_loss.1} parent=1 // pred_region
      _
    $region13: #{ppo_loss.1} parent=1 // pred_fallthru
      _
    // Predicated region
    $region14: #{ppo_loss.1} parent=1 // pred_check
      _
    $region15: #{ppo_loss.1} parent=1 // pred_check_branch
      %20 = sbr.rel (0) target = $region17
    $region16: #{ppo_loss.1} parent=1 // pred_region
      _
    $region17: #{ppo_loss.1} parent=1 // pred_fallthru
      _
    // Predicated region
    $region18: #{ppo_loss.1} parent=1 // pred_check
      _
    $region19: #{ppo_loss.1} parent=1 // pred_check_branch
      %22 = sbr.rel (0) target = $region21
    $region20: #{ppo_loss.1} parent=1 // pred_region
      _
    $region21: #{ppo_loss.1} parent=1 // pred_fallthru
      _
    // Predicated region
    $region22: #{ppo_loss.1} parent=1 // pred_check
      _
    $region23: #{ppo_loss.1} parent=1 // pred_check_branch
      %24 = sbr.rel (0) target = $region25
    $region24: #{ppo_loss.1} parent=1 // pred_region
      _
    $region25: #{ppo_loss.1} parent=1 // pred_fallthru
      _
    // Predicated region
    $region26: #{ppo_loss.1} parent=1 // pred_check
      _
    $region27: #{ppo_loss.1} parent=1 // pred_check_branch
      %26 = sbr.rel (0) target = $region29
    $region28: #{ppo_loss.1} parent=1 // pred_region
      _
    $region29: #{ppo_loss.1} parent=1 // pred_fallthru
      _
    %p27 = scmp.eq.s32.totalorder 0, 0
    // Predicated region
    $region30: #{ppo_loss.1} parent=1 // pred_check
      %p28 = pneg %p27
    $region31: #{ppo_loss.1} parent=1 // pred_check_branch
      %30 = sbr.rel (%p28) target = $region33
    $region32: #{ppo_loss.1} parent=1 // pred_region
      %vm31 = vcmask 0
      %32 = vst.msk [vmem:[#allocation2] sm:$0x1] %vm31, 0.0
    $region33: #{ppo_loss.1} parent=1 // pred_fallthru
      _
    %v33 = vld [vmem:[%s0] sm:$0xff]
    %v34 = vld [vmem:[%s3] sm:$0xff]
    %v35 = vld [vmem:[%s3 + $0x8] sm:$0xff]
    %v36 = vld [vmem:[%s3 + $0x10] sm:$0xff]
    %v37 = vld [vmem:[%s3 + $0x18] sm:$0xff]
    %v38 = vld [vmem:[%s4] sm:$0x1]
    %v39 = vld [vmem:[%s5] sm:$0xff]
    %v40 = vld [vmem:[%s5 + $0x8] sm:$0xff]
    %v41 = vld [vmem:[%s5 + $0x10] sm:$0xff]
    %v42 = vld [vmem:[%s5 + $0x18] sm:$0xff]
    %v43 = vld [vmem:[%s5 + $0x20] sm:$0xff]
    %v44 = vld [vmem:[%s5 + $0x28] sm:$0xff]
    %v45 = vld [vmem:[%s5 + $0x30] sm:$0xff]
    %v46 = vld [vmem:[%s5 + $0x38] sm:$0xff]
    %v47 = vld [vmem:[%s6] sm:$0x1]
    %v49 = vlaneseq
    %v50 = vshrl.u32 %v49, 7
    %v51 = vsub.s32 0, %v50
    %v52 = vrot.slane %v38, %v51
    %vm54 = vcmask 261120
    %v56 = vsel %vm54, %v33, 0
    %58 = vmatprep.subr.mxu0 0.0
    %59 = vmatpush1.msra.mxu0 0.0
    %60 = vmatprep.subr.mxu0 0.0
    %61 = vmatpush1.msra.mxu0 0.0
    %62 = vmatprep.subr.mxu0 0.0
    %63 = vmatpush1.msra.mxu0 0.0
    %64 = vmatprep.subr.mxu0 0.0
    %65 = vmatpush1.msra.mxu0 0.0
    %66 = vmatprep.subr.mxu0 0.0
    %67 = vmatpush1.msra.mxu0 0.0
    %68 = vmatprep.subr.mxu0 0.0
    %69 = vmatpush1.msra.mxu0 0.0
    %70 = vmatprep.subr.mxu0 0.0
    %71 = vmatpush1.msra.mxu0 0.0
    %72 = vmatprep.subr.mxu0 0.0
    %73 = vmatpush1.msra.mxu0 0.0
    %74 = vmatprep.subr.mxu0 0.0
    %75 = vmatpush1.msra.mxu0 0.0
    %76 = vmatprep.subr.mxu0 0.0
    %77 = vmatpush1.msra.mxu0 0.0
    %78 = vmatprep.subr.mxu0 0.0
    %79 = vmatpush1.msra.mxu0 0.0
    %80 = vmatprep.subr.mxu0 0.0
    %81 = vmatpush1.msra.mxu0 0.0
    %82 = vmatprep.subr.mxu0 0.0
    %83 = vmatpush1.msra.mxu0 %v37
    %84 = vmatprep.subr.mxu0 0.0
    %85 = vmatpush1.msra.mxu0 %v36
    %86 = vmatprep.subr.mxu0 0.0
    %87 = vmatpush1.msra.mxu0 %v35
    %88 = vmatprep.subr.mxu0 0.0
    %89 = vmatpush1.msra.mxu0 %v34
    %90 = vmatprep.subr.mxu0 0.0
    %91 = vmatpush2.msra.mxu0 0.0
    %92 = vmatprep.subr.mxu0 0.0
    %93 = vmatpush2.msra.mxu0 0.0
    %94 = vmatprep.subr.mxu0 0.0
    %95 = vmatpush2.msra.mxu0 0.0
    %96 = vmatprep.subr.mxu0 0.0
    %97 = vmatpush2.msra.mxu0 0.0
    %98 = vmatprep.subr.mxu0 0.0
    %99 = vmatpush2.msra.mxu0 0.0
    %100 = vmatprep.subr.mxu0 0.0
    %101 = vmatpush2.msra.mxu0 0.0
    %102 = vmatprep.subr.mxu0 0.0
    %103 = vmatpush2.msra.mxu0 0.0
    %104 = vmatprep.subr.mxu0 0.0
    %105 = vmatpush2.msra.mxu0 0.0
    %106 = vmatprep.subr.mxu0 0.0
    %107 = vmatpush2.msra.mxu0 0.0
    %108 = vmatprep.subr.mxu0 0.0
    %109 = vmatpush2.msra.mxu0 0.0
    %110 = vmatprep.subr.mxu0 0.0
    %111 = vmatpush2.msra.mxu0 0.0
    %112 = vmatprep.subr.mxu0 0.0
    %113 = vmatpush2.msra.mxu0 0.0
    %114 = vmatprep.subr.mxu0 0.0
    %115 = vmatpush2.msra.mxu0 0.0
    %116 = vmatprep.subr.mxu0 0.0
    %117 = vmatpush2.msra.mxu0 0.0
    %118 = vmatprep.subr.mxu0 0.0
    %119 = vmatpush2.msra.mxu0 0.0
    %120 = vmatprep.subr.mxu0 0.0
    %121 = vmatpush2.msra.mxu0 0.0
    %122 = vmatprep.mubr.f32.mxu0 0.0
    %123 = vmatmul.mubr.f32.gmra.mxu0 %v56
    %v124 = vpop.f32.mrf.mxu0
    %v125 = vadd.f32 %v52, %v124
    %v126 = vpop.f32.mrf.mxu0
    %127 = vdwg.mxu0
    %v128 = vmax.f32 %v125, 0.0
    %v130 = vlaneseq
    %v131 = vshrl.u32 %v130, 7
    %v132 = vsub.s32 0, %v131
    %v133 = vrot.slane %v47, %v132
    %vm135 = vcmask 523264
    %v137 = vsel %vm135, %v128, 0
    %139 = vmatprep.subr.mxu0 0.0
    %140 = vmatpush1.msra.mxu0 0.0
    %141 = vmatprep.subr.mxu0 0.0
    %142 = vmatpush1.msra.mxu0 0.0
    %143 = vmatprep.subr.mxu0 0.0
    %144 = vmatpush1.msra.mxu0 0.0
    %145 = vmatprep.subr.mxu0 0.0
    %146 = vmatpush1.msra.mxu0 0.0
    %147 = vmatprep.subr.mxu0 0.0
    %148 = vmatpush1.msra.mxu0 0.0
    %149 = vmatprep.subr.mxu0 0.0
    %150 = vmatpush1.msra.mxu0 0.0
    %151 = vmatprep.subr.mxu0 0.0
    %152 = vmatpush1.msra.mxu0 0.0
    %153 = vmatprep.subr.mxu0 0.0
    %154 = vmatpush1.msra.mxu0 0.0
    %155 = vmatprep.subr.mxu0 0.0
    %156 = vmatpush1.msra.mxu0 %v46
    %157 = vmatprep.subr.mxu0 0.0
    %158 = vmatpush1.msra.mxu0 %v45
    %159 = vmatprep.subr.mxu0 0.0
    %160 = vmatpush1.msra.mxu0 %v44
    %161 = vmatprep.subr.mxu0 0.0
    %162 = vmatpush1.msra.mxu0 %v43
    %163 = vmatprep.subr.mxu0 0.0
    %164 = vmatpush1.msra.mxu0 %v42
    %165 = vmatprep.subr.mxu0 0.0
    %166 = vmatpush1.msra.mxu0 %v41
    %167 = vmatprep.subr.mxu0 0.0
    %168 = vmatpush1.msra.mxu0 %v40
    %169 = vmatprep.subr.mxu0 0.0
    %170 = vmatpush1.msra.mxu0 %v39
    %171 = vmatprep.subr.mxu0 0.0
    %172 = vmatpush2.msra.mxu0 0.0
    %173 = vmatprep.subr.mxu0 0.0
    %174 = vmatpush2.msra.mxu0 0.0
    %175 = vmatprep.subr.mxu0 0.0
    %176 = vmatpush2.msra.mxu0 0.0
    %177 = vmatprep.subr.mxu0 0.0
    %178 = vmatpush2.msra.mxu0 0.0
    %179 = vmatprep.subr.mxu0 0.0
    %180 = vmatpush2.msra.mxu0 0.0
    %181 = vmatprep.subr.mxu0 0.0
    %182 = vmatpush2.msra.mxu0 0.0
    %183 = vmatprep.subr.mxu0 0.0
    %184 = vmatpush2.msra.mxu0 0.0
    %185 = vmatprep.subr.mxu0 0.0
    %186 = vmatpush2.msra.mxu0 0.0
    %187 = vmatprep.subr.mxu0 0.0
    %188 = vmatpush2.msra.mxu0 0.0
    %189 = vmatprep.subr.mxu0 0.0
    %190 = vmatpush2.msra.mxu0 0.0
    %191 = vmatprep.subr.mxu0 0.0
    %192 = vmatpush2.msra.mxu0 0.0
    %193 = vmatprep.subr.mxu0 0.0
    %194 = vmatpush2.msra.mxu0 0.0
    %195 = vmatprep.subr.mxu0 0.0
    %196 = vmatpush2.msra.mxu0 0.0
    %197 = vmatprep.subr.mxu0 0.0
    %198 = vmatpush2.msra.mxu0 0.0
    %199 = vmatprep.subr.mxu0 0.0
    %200 = vmatpush2.msra.mxu0 0.0
    %201 = vmatprep.subr.mxu0 0.0
    %202 = vmatpush2.msra.mxu0 0.0
    %203 = vmatprep.mubr.f32.mxu0 0.0
    %204 = vmatmul.mubr.f32.gmra.mxu0 %v137
    %v205 = vpop.f32.mrf.mxu0
    %v206 = vadd.f32 %v133, %v205
    %v207 = vpop.f32.mrf.mxu0
    %208 = vdwg.mxu0
    %vm209 = vcmask 15360
    %v210 = vsel %vm209, %v206, -inf
    %211 = vmax.xlane.f32.xlu0 %v210
    %v212 = vpop.xlane.xlu0 %211
    %v213 = vsub.f32 %v206, %v212
    %v214 = vmul.f32 %v213, 1.442695
    %v215 = vpow.pop %v214
    %v216 = vsel %vm209, %v215, 0.0
    %217 = vadd.xlane.f32.xlu0 %v216
    %v218 = vpop.xlane.xlu0 %217
    %v219 = vrcp.pop %v218
    %v220 = vmul.f32 %v215, %v219
    %v221 = vld [vmem:[%s1] sm:$0xff]
    %v222 = vlaneseq
    %v223 = vand.u32 %v222, 127
    %224 = vset.pattern.permute.xlu0 0
    %225 = vperm.xlu0 %224, %v221
    %v226 = vpop.permute.xlu0 %225
    %vm227 = vcmp.eq.s32.totalorder %v223, %v226
    %v228 = vsel %vm227, 1, 0
    %v229 = vcvt.s32.f32 %v228
    %v230 = vld [vmem:[%s2] sm:$0xff]
    %v231 = vmax.f32 %v230, 1e-08
    %v232 = vmul.f32 %v220, %v229
    %v233 = vsel %vm209, %v232, 0.0
    %234 = vadd.xlane.f32.xlu0 %v233
    %v235 = vpop.xlane.xlu0 %234
    %v236 = vrcp.pop %v231
    %v237 = vmul.f32 %v235, %v236
    %239 = vrot.lane.b32.xlu0 %v230, 127
    %v240 = vpop.permute.xlu0 %239
    %v242 = vmul.f32 %v237, %v240
    %v243 = vmax.f32 %v237, 0.9
    %v244 = vmin.f32 %v243, 1.1
    %v245 = vmul.f32 %v244, %v240
    %v246 = vmin.f32 %v242, %v245
    %v247 = vsub.f32 0.0, %v246
    %v248 = vlaneseq
    %v249 = vshrl.u32 %v248, 7
    %s250 = smul.u32 0, 8
    %v251 = vstv %s250
    %v252 = vadd.s32 %v249, %v251
    %vm253 = vcmp.lt.s32.totalorder %v252, 8
    %v254 = vsel %vm253, %v247, 0.0
    %v255 = vld [vmem:[#allocation2] sm:$0x1]
    %vm256 = vcmask 7168
    %v257 = vsel %vm256, %v254, 0.0
    %258 = vadd.xlane.f32.xlu0 %v257
    %v259 = vpop.xlane.xlu0 %258
    %v260 = vrot.slane %v259, 4
    %v261 = vadd.f32 %v259, %v260
    %v262 = vrot.slane %v261, 2
    %v263 = vadd.f32 %v261, %v262
    %v264 = vrot.slane %v263, 1
    %v265 = vadd.f32 %v263, %v264
    %s266 = vtos %v265
    %v267 = vstv %s266
    %v268 = vadd.f32 %v255, %v267
    %vm269 = vcmask 0
    %270 = vst.msk [vmem:[#allocation2] sm:$0x1] %vm269, %v268
    // Predicated region
    $region34: #{ppo_loss.1} parent=1 // pred_check
      %p271 = pneg %p27
    $region35: #{ppo_loss.1} parent=1 // pred_check_branch
      %273 = sbr.rel (%p271) target = $region37
    $region36: #{ppo_loss.1} parent=1 // pred_region
      %v274 = vld [vmem:[#allocation2] sm:$0x1]
      %v275 = vrcp.pop 8.0
      %v276 = vmul.f32 %v274, %v275
      %277 = vst.msk [vmem:[#allocation2] sm:$0x1] %vm269, %v276
    $region37: #{ppo_loss.1} parent=1 // pred_fallthru
      _
    // Predicated region
    $region38: #{ppo_loss.1} parent=1 // pred_check
      _
    $region39: #{ppo_loss.1} parent=1 // pred_check_branch
      %279 = sbr.rel (0) target = $region41
    $region40: #{ppo_loss.1} parent=1 // pred_region
      %s281 = ssub.s32 16, 16
      %282 = vsyncadd [#allocation3], %s281
      %s284 = sshll.u32 [#allocation2], 4
      %s285 = int_to_ptr.vmem [resolvable:$true] %s284
      %287 = dma.vmem_to_hbm [thread:$0]  %s285, 16, %s7, [#allocation3]
    $region41: #{ppo_loss.1} parent=1 // pred_fallthru
      _
    // Predicated region
    $region42: #{ppo_loss.1} parent=1 // pred_check
      _
    $region43: #{ppo_loss.1} parent=1 // pred_check_branch
      %289 = sbr.rel (0) target = $region45
    $region44: #{ppo_loss.1} parent=1 // pred_region
      %290 = dma.done [#allocation3], 16
    $region45: #{ppo_loss.1} parent=1 // pred_fallthru
      _
    %291 = vsyncpa [#allocation3], 1

</llo_original>
